<compile_context>
chip_gen: v6e
topology: v6e:2x2x1
jax: 0.10.0
libtpu: 0.0.40
codegen_flags: <defaults>
</compile_context>

<pallas_src>
import jax
import jax.numpy as jnp
from jax.experimental import pallas as pl
from jax.experimental.pallas import tpu as pltpu


def _bias_postprocess_kernel(x_ref, bias_ref, alpha_ref, o_ref):
    # x_ref:     (tm, tl)  tile of the (N*C, H*W) activation slab
    # bias_ref:  (tm, 1)   per-row (= per (n, c)) bias, broadcast along lanes
    # alpha_ref: (tm, 1)   per-row scale, broadcast along lanes
    o_ref[...] = ((x_ref[...] + bias_ref[...]) * alpha_ref[...]).astype(o_ref.dtype)


def _round_up(x: int, m: int) -> int:
    return ((x + m - 1) // m) * m


def _per_row_param(p, N: int, C: int):
    """(1, C, 1, 1) or scalar param -> (N*C, 1) column (one value per row)."""
    p = jnp.asarray(p)
    if p.size == 1:                      # linear branch: scalar bias / alpha
        return jnp.full((N * C, 1), p.reshape(()), dtype=p.dtype)
    return jnp.broadcast_to(p.reshape(1, C), (N, C)).reshape(N * C, 1)


def bias_postprocess(x_nchw: jax.Array, q, bias, alpha,
                     *, target_tile_bytes: int = 2 * 1024 * 1024) -> jax.Array:
    """Pallas implementation of BiasPostprocess.forward (add_bias=True).

    x_nchw: (N, C, H, W);  q is unused (mirrors the PyTorch signature).
    Returns (x + bias) * alpha with per-channel bias/alpha.
    """
    del q  # unused, exactly as in the reference forward
    N, C, H, W = x_nchw.shape
    rows, L = N * C, H * W

    x2d = x_nchw.reshape(rows, L)                       # free reshape, no transpose
    bias_col = _per_row_param(bias, N, C)               # (rows, 1)
    alpha_col = _per_row_param(alpha, N, C)             # (rows, 1)
    out_dtype = jnp.result_type(x2d.dtype, bias_col.dtype, alpha_col.dtype)

    itemsize = jnp.dtype(x2d.dtype).itemsize
    # Sublane packing granule: f32 -> 8 rows, bf16 -> 16, int8/fp8 -> 32.
    sub = max(8, 32 // itemsize)

    # Lane tile: full row if even a minimal sub-row slab fits the budget,
    # otherwise a large multiple of 128 lanes (boundary block is masked).
    if L * itemsize * sub <= target_tile_bytes:
        tl = L
    else:
        tl = max(128, (target_tile_bytes // (itemsize * sub)) // 128 * 128)
        tl = min(tl, _round_up(L, 128))

    # Row tile: as many rows as fit the per-tile byte budget.
    tm = max(sub, (target_tile_bytes // (tl * itemsize)) // sub * sub)
    tm = min(tm, _round_up(rows, sub))

    grid = (pl.cdiv(rows, tm), pl.cdiv(L, tl))          # masked boundary blocks

    # Alias the activation slab to the output (mirrors PyTorch's in-place mul);
    # XLA inserts a copy if the buffer must be preserved, so this is safe.
    io_alias = {0: 0} if out_dtype == x2d.dtype else {}

    out2d = pl.pallas_call(
        _bias_postprocess_kernel,
        out_shape=jax.ShapeDtypeStruct((rows, L), out_dtype),
        grid_spec=pltpu.PrefetchScalarGridSpec(
            num_scalar_prefetch=0,
            grid=grid,
            in_specs=[
                pl.BlockSpec((tm, tl), lambda i, j: (i, j)),
                pl.BlockSpec((tm, 1), lambda i, j: (i, 0)),
                pl.BlockSpec((tm, 1), lambda i, j: (i, 0)),
            ],
            out_specs=pl.BlockSpec((tm, tl), lambda i, j: (i, j)),
        ),
        compiler_params=pltpu.CompilerParams(
            dimension_semantics=("parallel", "parallel"),
            vmem_limit_bytes=32 * 1024 * 1024,
        ),
        input_output_aliases=io_alias,
    )(x2d, bias_col, alpha_col)

    return out2d.reshape(N, C, H, W)


if __name__ == "__main__":
    key = jax.random.PRNGKey(0)
    kx, kq, kb, ka = jax.random.split(key, 4)

    N, C, H, W = 2, 4, 16, 16
    x = jax.random.normal(kx, (N, C, H, W), dtype=jnp.float32)
    q = jax.random.normal(kq, (N, C, H, W), dtype=jnp.float32)  # unused by forward

    # Module __init__ gives bias=zeros(1,C,1,1), alpha=ones(1,C,1,1); use
    # deterministic non-trivial values so the kernel does real work.
    bias = 0.1 * jax.random.normal(kb, (1, C, 1, 1), dtype=jnp.float32)
    alpha = 1.0 + 0.1 * jax.random.normal(ka, (1, C, 1, 1), dtype=jnp.float32)

    fwd = jax.jit(bias_postprocess)
    out = jax.block_until_ready(fwd(x, q, bias, alpha))

    # Pure-JAX reference of the PyTorch forward.
    ref = (x + bias) * alpha
    assert out.shape == x.shape and out.dtype == x.dtype
    assert jnp.allclose(out, ref, atol=1e-6, rtol=1e-6)

    print("KERNEL_OK")
</pallas_src>

<mosaic_0001>
module attributes {stable_mosaic.version = 11 : i64} {
  func.func @_bias_postprocess_kernel(%arg0: i32, %arg1: i32, %arg2: memref<8x256xf32, #tpu.memory_space<vmem>>, %arg3: memref<8x1xf32, #tpu.memory_space<vmem>>, %arg4: memref<8x1xf32, #tpu.memory_space<vmem>>, %arg5: memref<8x256xf32, #tpu.memory_space<vmem>>) attributes {dimension_semantics = [#tpu.dimension_semantics<parallel>, #tpu.dimension_semantics<parallel>], iteration_bounds = array<i64: 1, 1>, scalar_prefetch = 0 : i64, scratch_operands = 0 : i64, tpu.core_type = #tpu.core_type<tc>, window_params = [{transform_indices = @transform_0, window_bounds = array<i64: 8, 256>}, {transform_indices = @transform_1, window_bounds = array<i64: 8, 1>}, {transform_indices = @transform_2, window_bounds = array<i64: 8, 1>}, {transform_indices = @transform_3, window_bounds = array<i64: 8, 256>}]} {
    %c0 = arith.constant 0 : index
    %c0_0 = arith.constant 0 : index
    %0 = vector.load %arg2[%c0, %c0_0] : memref<8x256xf32, #tpu.memory_space<vmem>>, vector<8x256xf32>
    %c0_1 = arith.constant 0 : index
    %c0_2 = arith.constant 0 : index
    %1 = vector.load %arg3[%c0_1, %c0_2] : memref<8x1xf32, #tpu.memory_space<vmem>>, vector<8x1xf32>
    %2 = vector.broadcast %1 : vector<8x1xf32> to vector<8x256xf32>
    %3 = arith.addf %0, %2 : vector<8x256xf32>
    %c0_3 = arith.constant 0 : index
    %c0_4 = arith.constant 0 : index
    %4 = vector.load %arg4[%c0_3, %c0_4] : memref<8x1xf32, #tpu.memory_space<vmem>>, vector<8x1xf32>
    %5 = vector.broadcast %4 : vector<8x1xf32> to vector<8x256xf32>
    %6 = arith.mulf %3, %5 : vector<8x256xf32>
    %c0_5 = arith.constant 0 : index
    %c0_6 = arith.constant 0 : index
    %7 = vector.load %arg5[%c0_5, %c0_6] : memref<8x256xf32, #tpu.memory_space<vmem>>, vector<8x256xf32>
    tpu.vector_store %arg5[%c0_5, %c0_6], %6 {strides = array<i32>} : memref<8x256xf32, #tpu.memory_space<vmem>>, vector<8x256xf32>,
    return
  }
  func.func @transform_0(%arg0: i32, %arg1: i32) -> (i32, i32) {
    %c0_i32 = arith.constant 0 : i32
    return %arg0, %arg1 : i32, i32
  }
  func.func @transform_1(%arg0: i32, %arg1: i32) -> (i32, i32) {
    %c0_i32 = arith.constant 0 : i32
    %c0_i32_0 = arith.constant 0 : i32
    return %arg0, %c0_i32 : i32, i32
  }
  func.func @transform_2(%arg0: i32, %arg1: i32) -> (i32, i32) {
    %c0_i32 = arith.constant 0 : i32
    %c0_i32_0 = arith.constant 0 : i32
    return %arg0, %c0_i32 : i32, i32
  }
  func.func @transform_3(%arg0: i32, %arg1: i32) -> (i32, i32) {
    %c0_i32 = arith.constant 0 : i32
    return %arg0, %arg1 : i32, i32
  }
}

</mosaic_0001>

<llo_original>
// kernel: bias_postprocess.1
$region0: #{bias_postprocess.1}
  #allocation0 [shape = 'u32[]', space=smem, size = 0x4, offset = 0x4, fixed_abs, tag = 'smem constant byte address 0x4 - core index']
  #allocation1 [shape = 'u32[144,128]{1,0:T(1,128)}', space=vmem, size = 0x12000, scoped, tag = 'internal scratch']
  %s0 = inlined_call_operand.vmem [shape: f32[8,256], index: 0, kind: input, shape index: {}, may-alias: {0,3}]
  %s1 = inlined_call_operand.vmem [shape: f32[8,1], index: 1, kind: input, shape index: {}]
  %s2 = inlined_call_operand.vmem [shape: f32[8,1], index: 2, kind: input, shape index: {}]
  %s3 = inlined_call_operand.vmem [shape: f32[8,256], index: 3, kind: output, shape index: {}, may-alias: {0,3}]
  %s4 = sld [smem:[#allocation0]]
  $region22: #{bias_postprocess.1} parent=0
    _
  %s6 = ssub.s32 1, %s4
  %s7 = scalar_select 0, %s6, %s4
  // Predicated region
  $region2: #{bias_postprocess.1} parent=0 // pred_check
    _
  $region3: #{bias_postprocess.1} parent=0 // pred_check_branch
    %9 = sbr.rel (0) target = $region5
  $region4: #{bias_postprocess.1} parent=0 // pred_region
    _
  $region5: #{bias_postprocess.1} parent=0 // pred_fallthru
    _
  // Predicated region
  $region6: #{bias_postprocess.1} parent=0 // pred_check
    _
  $region7: #{bias_postprocess.1} parent=0 // pred_check_branch
    %11 = sbr.rel (0) target = $region9
  $region8: #{bias_postprocess.1} parent=0 // pred_region
    _
  $region9: #{bias_postprocess.1} parent=0 // pred_fallthru
    _
  // Predicated region
  $region10: #{bias_postprocess.1} parent=0 // pred_check
    _
  $region11: #{bias_postprocess.1} parent=0 // pred_check_branch
    %13 = sbr.rel (0) target = $region13
  $region12: #{bias_postprocess.1} parent=0 // pred_region
    _
  $region13: #{bias_postprocess.1} parent=0 // pred_fallthru
    _
  %v14 = vld [vmem:[%s0] sm:$0xff]
  %v15 = vld [vmem:[%s0 + $0x8] sm:$0xff]
  %v16 = vld [vmem:[%s1] sm:$0xff]
  %18 = vset.pattern.permute.xlu0 0
  %19 = vperm.xlu0 %18, %v16
  %v20 = vpop.permute.xlu0 %19
  %v22 = vadd.f32 %v14, %v20
  %v23 = vadd.f32 %v15, %v20
  %v24 = vld [vmem:[%s2] sm:$0xff]
  %26 = vset.pattern.permute.xlu0 0
  %27 = vperm.xlu0 %26, %v24
  %v28 = vpop.permute.xlu0 %27
  %v30 = vmul.f32 %v22, %v28
  %v31 = vmul.f32 %v23, %v28
  %32 = vst [vmem:[%s3] sm:$0xff] %v30
  %33 = vst [vmem:[%s3 + $0x8] sm:$0xff] %v31
  // Predicated region
  $region14: #{bias_postprocess.1} parent=0 // pred_check
    _
  $region15: #{bias_postprocess.1} parent=0 // pred_check_branch
    %35 = sbr.rel (0) target = $region17
  $region16: #{bias_postprocess.1} parent=0 // pred_region
    _
  $region17: #{bias_postprocess.1} parent=0 // pred_fallthru
    _
  // Predicated region
  $region18: #{bias_postprocess.1} parent=0 // pred_check
    _
  $region19: #{bias_postprocess.1} parent=0 // pred_check_branch
    %37 = sbr.rel (0) target = $region21
  $region20: #{bias_postprocess.1} parent=0 // pred_region
    _
  $region21: #{bias_postprocess.1} parent=0 // pred_fallthru
    _

</llo_original>
